<compile_context>
chip_gen: v7x
topology: tpu7x:2x2x1
jax: 0.10.0
libtpu: 0.0.40
codegen_flags: <defaults>
</compile_context>

<pallas_src>
import jax
import jax.numpy as jnp
from jax.experimental import pallas as pl
from jax.experimental.pallas import tpu as pltpu

_LANES = 128
# Below this many elements the pallas_call launch + wrapper reshapes dominate;
# XLA's fused elementwise multiply is already at the HBM roofline.
_SMALL_FALLBACK_ELEMS = 1 << 20
# ~4 MiB per input block on the large-tensor path (explicit vmem_limit_bytes
# keeps this legal on v5e's 16 MiB scoped-VMEM default too).
_TARGET_BLOCK_BYTES = 4 << 20
# Keep at least this many grid steps so the 2-deep pipeline fills and both
# v7x TensorCores get >= 4 steps each on mid-size inputs.
_MIN_GRID_STEPS = 8


def _sam_mul_kernel(x_ref, a_ref, o_ref):
    # Elementwise hot path: single VPU multiply on the whole VMEM tile.
    # Any mixed-dtype upcast happens here for free (kernel is DMA-bound).
    o_ref[...] = (x_ref[...] * a_ref[...]).astype(o_ref.dtype)


def _sublane_pack(dtype):
    # Native sublane packing: 32-bit -> 8, 16-bit -> 16, 8-bit -> 32.
    itemsize = jnp.dtype(dtype).itemsize
    return max(8, 32 // itemsize)


def _sam_mul_2d(x2d, a2d, out_dtype):
    """Pallas elementwise multiply of two lane-dense (rows, 128) slabs."""
    rows, lanes = x2d.shape
    x_item = jnp.dtype(x2d.dtype).itemsize
    a_item = jnp.dtype(a2d.dtype).itemsize
    o_item = jnp.dtype(out_dtype).itemsize

    # Sublane divisibility must satisfy every operand's native layout.
    pack = max(
        _sublane_pack(x2d.dtype), _sublane_pack(a2d.dtype), _sublane_pack(out_dtype)
    )

    if rows <= pack:
        # Full-extent single block (full array dims bypass the (8,128) rule).
        block_rows = rows
    else:
        widest = max(x_item, a_item, o_item)
        target_rows = max(
            pack, (_TARGET_BLOCK_BYTES // (lanes * widest)) // pack * pack
        )
        # Cap the block so the grid keeps >= _MIN_GRID_STEPS steps.
        cap_rows = max(pack, (rows // _MIN_GRID_STEPS) // pack * pack)
        block_rows = min(target_rows, cap_rows)

    grid = (pl.cdiv(rows, block_rows),)

    # 2-deep pipeline on each of the 3 arrays (x, a, out) + headroom.
    block_bytes = block_rows * lanes * (x_item + a_item + o_item)
    vmem_limit = min(max(2 * block_bytes + (4 << 20), 16 << 20), 48 << 20)

    bytes_accessed = rows * lanes * (x_item + a_item + o_item)

    return pl.pallas_call(
        _sam_mul_kernel,
        out_shape=jax.ShapeDtypeStruct((rows, lanes), out_dtype),
        grid_spec=pltpu.PrefetchScalarGridSpec(
            num_scalar_prefetch=0,
            grid=grid,
            in_specs=[
                pl.BlockSpec((block_rows, lanes), lambda i: (i, 0)),
                pl.BlockSpec((block_rows, lanes), lambda i: (i, 0)),
            ],
            out_specs=pl.BlockSpec((block_rows, lanes), lambda i: (i, 0)),
        ),
        compiler_params=pltpu.CompilerParams(
            # Single grid axis, independent steps -> shards across the two
            # TensorCores on v7x; neutral on v5e/v6e.
            dimension_semantics=("parallel",),
            vmem_limit_bytes=vmem_limit,
        ),
        cost_estimate=pl.CostEstimate(
            flops=rows * lanes,
            transcendentals=0,
            bytes_accessed=bytes_accessed,
        ),
    )(x2d, a2d)


def sam_forward(x, outputs, layers=(0,), min_kernel_elems=_SMALL_FALLBACK_ELEMS):
    """Pallas implementation of SAM.forward(x, outputs) == x * outputs[layers[0]]."""
    a = outputs[layers[0]]
    out_dtype = jnp.result_type(x.dtype, a.dtype)

    # Broadcasting (PyTorch `x * a` semantics), tiny tensors, or flat length
    # not a multiple of 128 lanes: plain XLA's fused multiply moves zero extra
    # bytes and is strictly faster than any pad/slice round trip.
    if x.shape != a.shape or x.size < min_kernel_elems or x.size % _LANES != 0:
        return (x * a).astype(out_dtype)

    orig_shape = x.shape
    rows = x.size // _LANES
    # No wrapper-side astype: native dtypes stream into the kernel; the cast
    # (if any) happens in-kernel, saving a full HBM pass on mixed dtypes.
    out2d = _sam_mul_2d(x.reshape(rows, _LANES), a.reshape(rows, _LANES), out_dtype)
    return out2d.reshape(orig_shape)


if __name__ == "__main__":
    key = jax.random.PRNGKey(0)
    kx, ka0, ka1, kb = jax.random.split(key, 4)

    # 1) Module-scale tiny NCHW case (2,4,16,16) -> small-input XLA fallback.
    x_small = jax.random.normal(kx, (2, 4, 16, 16), dtype=jnp.float32)
    outs_small = [
        jax.random.normal(ka0, (2, 4, 16, 16), dtype=jnp.float32),
        jax.random.normal(ka1, (2, 4, 16, 16), dtype=jnp.float32),
    ]
    y_small = jax.block_until_ready(sam_forward(x_small, outs_small, layers=[0]))
    ref_small = x_small * outs_small[0]
    assert y_small.shape == ref_small.shape and y_small.dtype == ref_small.dtype
    assert jnp.allclose(y_small, ref_small, atol=1e-6, rtol=1e-6)

    # 2) Force the Pallas kernel path on a lane-aligned NCHW activation (f32);
    #    exercises the min-grid-steps cap (rows=256 -> block_rows=32, grid=8).
    x_k = jax.random.normal(ka0, (2, 8, 32, 64), dtype=jnp.float32)
    a_k = jax.random.normal(ka1, (2, 8, 32, 64), dtype=jnp.float32)
    y_k = jax.block_until_ready(
        sam_forward(x_k, [a_k], layers=[0], min_kernel_elems=0)
    )
    assert jnp.allclose(y_k, x_k * a_k, atol=1e-6, rtol=1e-6)

    # 3) Ragged tail (flat length not a multiple of 128) -> XLA fallback
    #    (no pad/slice HBM round trip).
    x_r = jax.random.normal(kb, (2, 4, 15, 17), dtype=jnp.float32)
    a_r = jax.random.normal(kx, (2, 4, 15, 17), dtype=jnp.float32)
    y_r = jax.block_until_ready(
        sam_forward(x_r, [a_r], layers=[0], min_kernel_elems=0)
    )
    assert jnp.allclose(y_r, x_r * a_r, atol=1e-6, rtol=1e-6)

    # 4) bf16 x bf16 (dtype-aware native (16,128) tile path).
    x_b = jax.random.normal(ka0, (2, 16, 32, 128), dtype=jnp.bfloat16)
    a_b = jax.random.normal(ka1, (2, 16, 32, 128), dtype=jnp.bfloat16)
    y_b = jax.block_until_ready(
        sam_forward(x_b, [a_b], layers=[0], min_kernel_elems=0)
    )
    assert y_b.dtype == jnp.bfloat16
    assert jnp.allclose(
        y_b.astype(jnp.float32),
        (x_b * a_b).astype(jnp.float32),
        atol=1e-2,
        rtol=1e-2,
    )

    # 5) Mixed dtypes (bf16 x f32): no wrapper pre-cast, upcast happens in-kernel.
    x_m = jax.random.normal(kb, (2, 16, 32, 128), dtype=jnp.bfloat16)
    a_m = jax.random.normal(ka0, (2, 16, 32, 128), dtype=jnp.float32)
    y_m = jax.block_until_ready(
        sam_forward(x_m, [a_m], layers=[0], min_kernel_elems=0)
    )
    assert y_m.dtype == jnp.float32
    assert jnp.allclose(
        y_m, x_m.astype(jnp.float32) * a_m, atol=1e-2, rtol=1e-2
    )

    print("KERNEL_OK")
</pallas_src>

<mosaic_0001>
module attributes {stable_mosaic.version = 11 : i64} {
  func.func @_sam_mul_kernel(%arg0: i32, %arg1: memref<32x128xf32, #tpu.memory_space<vmem>>, %arg2: memref<32x128xf32, #tpu.memory_space<vmem>>, %arg3: memref<32x128xf32, #tpu.memory_space<vmem>>) attributes {dimension_semantics = [#tpu.dimension_semantics<parallel>], iteration_bounds = array<i64: 8>, scalar_prefetch = 0 : i64, scratch_operands = 0 : i64, tpu.core_type = #tpu.core_type<tc>, window_params = [{transform_indices = @transform_0, window_bounds = array<i64: 32, 128>}, {transform_indices = @transform_1, window_bounds = array<i64: 32, 128>}, {transform_indices = @transform_2, window_bounds = array<i64: 32, 128>}]} {
    %c0 = arith.constant 0 : index
    %c0_0 = arith.constant 0 : index
    %0 = vector.load %arg1[%c0, %c0_0] : memref<32x128xf32, #tpu.memory_space<vmem>>, vector<32x128xf32>
    %c0_1 = arith.constant 0 : index
    %c0_2 = arith.constant 0 : index
    %1 = vector.load %arg2[%c0_1, %c0_2] : memref<32x128xf32, #tpu.memory_space<vmem>>, vector<32x128xf32>
    %2 = arith.mulf %0, %1 : vector<32x128xf32>
    %c0_3 = arith.constant 0 : index
    %c0_4 = arith.constant 0 : index
    %3 = vector.load %arg3[%c0_3, %c0_4] : memref<32x128xf32, #tpu.memory_space<vmem>>, vector<32x128xf32>
    tpu.vector_store %arg3[%c0_3, %c0_4], %2 {strides = array<i32>} : memref<32x128xf32, #tpu.memory_space<vmem>>, vector<32x128xf32>,
    return
  }
  func.func @transform_0(%arg0: i32) -> (i32, i32) {
    %c0_i32 = arith.constant 0 : i32
    %c0_i32_0 = arith.constant 0 : i32
    return %arg0, %c0_i32 : i32, i32
  }
  func.func @transform_1(%arg0: i32) -> (i32, i32) {
    %c0_i32 = arith.constant 0 : i32
    %c0_i32_0 = arith.constant 0 : i32
    return %arg0, %c0_i32 : i32, i32
  }
  func.func @transform_2(%arg0: i32) -> (i32, i32) {
    %c0_i32 = arith.constant 0 : i32
    %c0_i32_0 = arith.constant 0 : i32
    return %arg0, %c0_i32 : i32, i32
  }
}

</mosaic_0001>

<llo_original>
// kernel: tpu_custom_call.1
$region0: #{tpu_custom_call.1}
  #allocation0 [shape = 'u32[]', space=smem, size = 0x4, offset = 0x4, fixed_abs, tag = 'smem constant byte address 0x4 - core index']
  #allocation1 [shape = 'u32[144,128]{1,0:T(1,128)}', space=vmem, size = 0x12000, scoped, tag = 'internal scratch']
  %s0 = inlined_call_operand.hbm [shape: f32[256,128], index: 0, kind: input, shape index: {}]
  %s1 = inlined_call_operand.hbm [shape: f32[256,128], index: 1, kind: input, shape index: {}]
  %s2 = inlined_call_operand.hbm [shape: f32[256,128], index: 2, kind: output, shape index: {}]
  %s3 = sld [smem:[#allocation0]]
  $region49: #{tpu_custom_call.1} parent=0
    _
  %s5 = ssub.s32 1, %s3
  %s6 = scalar_select 0, %s5, %s3
  $region1: #{tpu_custom_call.1} parent=0
    #allocation2 [shape = 'u8[32768]{0}', space=vmem, size = 0x8000, scoped, tag = 'input window, operand 0']
    #allocation3 [shape = 's32[2]{0}', space=sflag, size = 0x8, scoped, tag = 'scoped memory for tpu_custom_call.1']
    #allocation4 [shape = 's32[2]{0}', space=sflag, size = 0x8, scoped, tag = 'scoped memory for tpu_custom_call.1']
    #allocation5 [shape = 'u8[32768]{0}', space=vmem, size = 0x8000, scoped, tag = 'input window, operand 1']
    #allocation6 [shape = 's32[2]{0}', space=sflag, size = 0x8, scoped, tag = 'scoped memory for tpu_custom_call.1']
    #allocation7 [shape = 'u8[32768]{0}', space=vmem, size = 0x8000, scoped, tag = 'output window, operand 0']
    %7 = vsyncpa [#allocation3], 0
    %s8 = scalar_lea.sflag [#allocation3], 1
    %9 = vsyncpa %s8, 0
    %10 = vsyncpa [#allocation6], 0
    %s11 = scalar_lea.sflag [#allocation6], 1
    %12 = vsyncpa %s11, 0
    %13 = vsyncpa [#allocation4], 0
    %s14 = scalar_lea.sflag [#allocation4], 1
    %15 = vsyncpa %s14, 0
    loop: start=0, step=1, limit=10
    $region2: #{tpu_custom_call.1} parent=1 // loop_pre_header
      _
    $region3: #{tpu_custom_call.1} parent=1 // loop_header
      %s17 = sphi 0, %s21
      %p18 = scmp.ge.s32.totalorder %s17, 10
      %s27 = sphi 0, %s29
      %s30 = sphi 0, %s27
      %s31 = sphi 0, %s30
      %s47 = sphi 0, %s31
      %s53 = sphi 0, %s55
      %s56 = sphi 0, %s53
      %s57 = sphi 0, %s56
      %s73 = sphi 0, %s57
      %s79 = sphi 0, %s81
      %s82 = sphi 0, %s79
      %s83 = sphi 0, %s82
      %s99 = sphi 0, %s83
    $region4: #{tpu_custom_call.1} parent=1 // loop_header_branch
      %20 = sbr.rel (%p18) target = $region8
    $region5: #{tpu_custom_call.1} parent=1 // loop_body
      %s22 = ssub.s32 %s17, 1
      %s23 = ssub.s32 %s17, 2
      %s24 = sadd.s32 %s17, 1
      %s25 = ssub.s32 %s17, %s24
      %p26 = scmp.eq.s32.totalorder %s25, 0
      %s28 = sadd.s32 %s27, 1
      %s29 = scalar_select %p26, %s27, %s28
      %p32 = pneg %p26
      %p33 = scmp.eq.s32.totalorder %s17, 7
      %p34 = por %p32, %p33
      %p35 = scmp.ne.s32.totalorder %s27, %s30
      %p36 = scmp.eq.s32.totalorder %s17, 0
      %p37 = por %p35, %p36
      %p38 = scmp.ne.s32.totalorder %s27, %s30
      %p39 = scmp.eq.s32.totalorder %s22, 7
      %p40 = por %p38, %p39
      %p41 = scmp.ne.s32.totalorder %s30, %s31
      %p42 = scmp.eq.s32.totalorder %s22, 0
      %p43 = por %p41, %p42
      %p44 = scmp.ne.s32.totalorder %s30, %s31
      %p45 = scmp.eq.s32.totalorder %s23, 7
      %p46 = por %p44, %p45
      %p48 = scmp.ne.s32.totalorder %s31, %s47
      %p49 = scmp.eq.s32.totalorder %s23, 0
      %p50 = por %p48, %p49
      %s51 = ssub.s32 %s17, %s24
      %p52 = scmp.eq.s32.totalorder %s51, 0
      %s54 = sadd.s32 %s53, 1
      %s55 = scalar_select %p52, %s53, %s54
      %p58 = pneg %p52
      %p59 = scmp.eq.s32.totalorder %s17, 7
      %p60 = por %p58, %p59
      %p61 = scmp.ne.s32.totalorder %s53, %s56
      %p62 = scmp.eq.s32.totalorder %s17, 0
      %p63 = por %p61, %p62
      %p64 = scmp.ne.s32.totalorder %s53, %s56
      %p65 = scmp.eq.s32.totalorder %s22, 7
      %p66 = por %p64, %p65
      %p67 = scmp.ne.s32.totalorder %s56, %s57
      %p68 = scmp.eq.s32.totalorder %s22, 0
      %p69 = por %p67, %p68
      %p70 = scmp.ne.s32.totalorder %s56, %s57
      %p71 = scmp.eq.s32.totalorder %s23, 7
      %p72 = por %p70, %p71
      %p74 = scmp.ne.s32.totalorder %s57, %s73
      %p75 = scmp.eq.s32.totalorder %s23, 0
      %p76 = por %p74, %p75
      %s77 = ssub.s32 %s17, %s24
      %p78 = scmp.eq.s32.totalorder %s77, 0
      %s80 = sadd.s32 %s79, 1
      %s81 = scalar_select %p78, %s79, %s80
      %p84 = pneg %p78
      %p85 = scmp.eq.s32.totalorder %s17, 7
      %p86 = por %p84, %p85
      %p87 = scmp.ne.s32.totalorder %s79, %s82
      %p88 = scmp.eq.s32.totalorder %s17, 0
      %p89 = por %p87, %p88
      %p90 = scmp.ne.s32.totalorder %s79, %s82
      %p91 = scmp.eq.s32.totalorder %s22, 7
      %p92 = por %p90, %p91
      %p93 = scmp.ne.s32.totalorder %s82, %s83
      %p94 = scmp.eq.s32.totalorder %s22, 0
      %p95 = por %p93, %p94
      %p96 = scmp.ne.s32.totalorder %s82, %s83
      %p97 = scmp.eq.s32.totalorder %s23, 7
      %p98 = por %p96, %p97
      %p100 = scmp.ne.s32.totalorder %s83, %s99
      %p101 = scmp.eq.s32.totalorder %s23, 0
      %p102 = por %p100, %p101
      %p103 = scmp.le.s32.totalorder 1, %s17
      %p104 = scmp.lt.s32.totalorder %s17, 9
      %p105 = pnand %p103, %p104
      %p106 = pneg %p105
      // Predicated region
      $region9: #{tpu_custom_call.1} parent=5 // pred_check
        _
      $region10: #{tpu_custom_call.1} parent=5 // pred_check_branch
        %108 = sbr.rel (%p105) target = $region12
      $region11: #{tpu_custom_call.1} parent=5 // pred_region
        %s109 = ssub.s32 %s17, 1
      $region12: #{tpu_custom_call.1} parent=5 // pred_fallthru
        _
      %p110 = scmp.lt.s32.totalorder %s17, 8
      // Predicated region
      $region13: #{tpu_custom_call.1} parent=5 // pred_check
        %p111 = pneg %p110
      $region14: #{tpu_custom_call.1} parent=5 // pred_check_branch
        %113 = sbr.rel (%p111) target = $region16
      $region15: #{tpu_custom_call.1} parent=5 // pred_region
        // Predicated region
        $region17: #{tpu_custom_call.1} parent=15 // pred_check
          %p114 = pneg %p37
        $region18: #{tpu_custom_call.1} parent=15 // pred_check_branch
          %116 = sbr.rel (%p114) target = $region20
        $region19: #{tpu_custom_call.1} parent=15 // pred_region
          %s117 = sand.u32 %s27, 1
          %s118 = scalar_lea.sflag [#allocation3], %s117
          %s119 = sand.u32 %s27, 1
          %s120 = smul.addr %s119, 32
          %s121 = scalar_lea.vmem [#allocation2], %s120
          %s122 = smul.u32 4, %s17
          %s124 = ssub.s32 512, 512
          %125 = vsyncadd %s118, %s124
          %s126 = smul.addr %s122, 128
          %s127 = scalar_lea.hbm %s0, %s126
          %s128 = sshll.u32 %s121, 4
          %s129 = int_to_ptr.vmem [resolvable:$true] %s128
          %134 = dma.hbm_to_vmem [thread:$0]  %s127, 512, %s129, %s118, 128, 128, 8
        $region20: #{tpu_custom_call.1} parent=15 // pred_fallthru
          _
        // Predicated region
        $region21: #{tpu_custom_call.1} parent=15 // pred_check
          %p135 = pneg %p63
        $region22: #{tpu_custom_call.1} parent=15 // pred_check_branch
          %137 = sbr.rel (%p135) target = $region24
        $region23: #{tpu_custom_call.1} parent=15 // pred_region
          %s138 = sand.u32 %s53, 1
          %s139 = scalar_lea.sflag [#allocation6], %s138
          %s140 = sand.u32 %s53, 1
          %s141 = smul.addr %s140, 32
          %s142 = scalar_lea.vmem [#allocation5], %s141
          %s143 = smul.u32 4, %s17
          %s145 = ssub.s32 512, 512
          %146 = vsyncadd %s139, %s145
          %s147 = smul.addr %s143, 128
          %s148 = scalar_lea.hbm %s1, %s147
          %s149 = sshll.u32 %s142, 4
          %s150 = int_to_ptr.vmem [resolvable:$true] %s149
          %155 = dma.hbm_to_vmem [thread:$0]  %s148, 512, %s150, %s139, 128, 128, 8
        $region24: #{tpu_custom_call.1} parent=15 // pred_fallthru
          _
      $region16: #{tpu_custom_call.1} parent=5 // pred_fallthru
        _
      %p156 = scmp.le.s32.totalorder 1, %s17
      %p157 = scmp.lt.s32.totalorder %s17, 9
      %p158 = pnand %p156, %p157
      %p159 = pneg %p158
      // Predicated region
      $region25: #{tpu_custom_call.1} parent=5 // pred_check
        _
      $region26: #{tpu_custom_call.1} parent=5 // pred_check_branch
        %161 = sbr.rel (%p158) target = $region28
      $region27: #{tpu_custom_call.1} parent=5 // pred_region
        %s162 = ssub.s32 %s17, 1
        %s163 = sand.u32 %s30, 1
        %s164 = scalar_lea.sflag [#allocation3], %s163
        %s165 = sand.u32 %s30, 1
        %s166 = smul.addr %s165, 32
        %s167 = scalar_lea.vmem [#allocation2], %s166
        // Predicated region
        $region29: #{tpu_custom_call.1} parent=27 // pred_check
          %p168 = pneg %p43
        $region30: #{tpu_custom_call.1} parent=27 // pred_check_branch
          %170 = sbr.rel (%p168) target = $region32
        $region31: #{tpu_custom_call.1} parent=27 // pred_region
          %171 = dma.done %s164, 512
        $region32: #{tpu_custom_call.1} parent=27 // pred_fallthru
          _
        %s172 = sand.u32 %s56, 1
        %s173 = scalar_lea.sflag [#allocation6], %s172
        %s174 = sand.u32 %s56, 1
        %s175 = smul.addr %s174, 32
        %s176 = scalar_lea.vmem [#allocation5], %s175
        // Predicated region
        $region33: #{tpu_custom_call.1} parent=27 // pred_check
          %p177 = pneg %p69
        $region34: #{tpu_custom_call.1} parent=27 // pred_check_branch
          %179 = sbr.rel (%p177) target = $region36
        $region35: #{tpu_custom_call.1} parent=27 // pred_region
          %180 = dma.done %s173, 512
        $region36: #{tpu_custom_call.1} parent=27 // pred_fallthru
          _
        %s181 = sand.u32 %s30, 1
        %s182 = scalar_lea.sflag [#allocation3], %s181
        %s183 = sand.u32 %s30, 1
        %s184 = smul.addr %s183, 32
        %s185 = scalar_lea.vmem [#allocation2], %s184
        %p186 = pneg %p43
        %p187 = pneg %p40
        %s188 = sand.u32 %s56, 1
        %s189 = scalar_lea.sflag [#allocation6], %s188
        %s190 = sand.u32 %s56, 1
        %s191 = smul.addr %s190, 32
        %s192 = scalar_lea.vmem [#allocation5], %s191
        %p193 = pneg %p69
        %p194 = pneg %p66
        %p195 = pneg %p95
        %p196 = pneg %p92
        %s197 = sand.u32 %s82, 1
        %s198 = scalar_lea.sflag [#allocation4], %s197
        %s199 = sand.u32 %s82, 1
        %s200 = smul.addr %s199, 32
        %s201 = scalar_lea.vmem [#allocation7], %s200
        %s202 = smul.u32 4, %s22
        %s203 = smul.u32 4, %s22
        %s204 = smul.u32 4, %s22
        %v205 = vld [vmem:[%s167] sm:$0xff]
        %v206 = vld [vmem:[%s167 + $0x8] sm:$0xff]
        %v207 = vld [vmem:[%s167 + $0x10] sm:$0xff]
        %v208 = vld [vmem:[%s167 + $0x18] sm:$0xff]
        %v209 = vld [vmem:[%s176] sm:$0xff]
        %v210 = vld [vmem:[%s176 + $0x8] sm:$0xff]
        %v211 = vld [vmem:[%s176 + $0x10] sm:$0xff]
        %v212 = vld [vmem:[%s176 + $0x18] sm:$0xff]
        %v213 = vmul.f32 %v205, %v209
        %v214 = vmul.f32 %v206, %v210
        %v215 = vmul.f32 %v207, %v211
        %v216 = vmul.f32 %v208, %v212
        %217 = vst [vmem:[%s201] sm:$0xff] %v213
        %218 = vst [vmem:[%s201 + $0x8] sm:$0xff] %v214
        %219 = vst [vmem:[%s201 + $0x10] sm:$0xff] %v215
        %220 = vst [vmem:[%s201 + $0x18] sm:$0xff] %v216
        %s221 = sand.u32 %s82, 1
        %s222 = scalar_lea.sflag [#allocation4], %s221
        %s223 = sand.u32 %s82, 1
        %s224 = smul.addr %s223, 32
        %s225 = scalar_lea.vmem [#allocation7], %s224
        // Predicated region
        $region37: #{tpu_custom_call.1} parent=27 // pred_check
          %p226 = pneg %p92
        $region38: #{tpu_custom_call.1} parent=27 // pred_check_branch
          %228 = sbr.rel (%p226) target = $region40
        $region39: #{tpu_custom_call.1} parent=27 // pred_region
          %s229 = smul.u32 4, %s22
          %s231 = ssub.s32 512, 512
          %232 = vsyncadd %s222, %s231
          %s233 = smul.addr %s229, 128
          %s234 = scalar_lea.hbm %s2, %s233
          %s235 = sshll.u32 %s225, 4
          %s236 = int_to_ptr.vmem [resolvable:$true] %s235
          %241 = dma.vmem_to_hbm [thread:$0]  %s236, 512, %s234, %s222, 128, 128, 8
        $region40: #{tpu_custom_call.1} parent=27 // pred_fallthru
          _
      $region28: #{tpu_custom_call.1} parent=5 // pred_fallthru
        _
      %p242 = scmp.le.s32.totalorder 2, %s17
      // Predicated region
      $region41: #{tpu_custom_call.1} parent=5 // pred_check
        %p243 = pneg %p242
      $region42: #{tpu_custom_call.1} parent=5 // pred_check_branch
        %245 = sbr.rel (%p243) target = $region44
      $region43: #{tpu_custom_call.1} parent=5 // pred_region
        %s246 = ssub.s32 %s17, 2
        // Predicated region
        $region45: #{tpu_custom_call.1} parent=43 // pred_check
          %p247 = pneg %p98
        $region46: #{tpu_custom_call.1} parent=43 // pred_check_branch
          %249 = sbr.rel (%p247) target = $region48
        $region47: #{tpu_custom_call.1} parent=43 // pred_region
          %s250 = sand.u32 %s83, 1
          %s251 = scalar_lea.sflag [#allocation4], %s250
          %s252 = sand.u32 %s83, 1
          %s253 = smul.addr %s252, 32
          %s254 = scalar_lea.vmem [#allocation7], %s253
          %255 = dma.done %s251, 512
        $region48: #{tpu_custom_call.1} parent=43 // pred_fallthru
          _
      $region44: #{tpu_custom_call.1} parent=5 // pred_fallthru
        _
    $region6: #{tpu_custom_call.1} parent=1 // loop_footer
      %s21 = sadd.s32 1, %s17
    $region7: #{tpu_custom_call.1} parent=1 // loop_footer_branch
      %16 = sbr.rel target = $region3
    $region8: #{tpu_custom_call.1} parent=1 // loop_exit
      _
    %256 = vsyncpa [#allocation3], 1
    %s257 = scalar_lea.sflag [#allocation3], 1
    %258 = vsyncpa %s257, 1
    %259 = vsyncpa [#allocation6], 1
    %s260 = scalar_lea.sflag [#allocation6], 1
    %261 = vsyncpa %s260, 1
    %262 = vsyncpa [#allocation4], 1
    %s263 = scalar_lea.sflag [#allocation4], 1
    %264 = vsyncpa %s263, 1

</llo_original>
